<compile_context>
chip_gen: v6e
topology: v6e:2x2x1
jax: 0.10.0
libtpu: 0.0.40
codegen_flags: <defaults>
</compile_context>

<pallas_src>
import functools

import jax
import jax.numpy as jnp
from jax.experimental import pallas as pl
from jax.experimental.pallas import tpu as pltpu

_TM_MAX = 512            # max rows per tile
_K_TILE_THRESHOLD = 2048  # start K-tiling (accumulator path) above this d_input


def _round_up(x: int, m: int) -> int:
    return (x + m - 1) // m * m


def _pick_row_tile(M: int):
    """Pick (tm, M_pad). Prefer a multiple-of-8 divisor of M (no padding);
    aim for >=2 row blocks when M is moderate (v7x megacore)."""
    if M < 8:
        return M, M                       # full-extent block is legal
    cap = min(_TM_MAX, M)
    if 16 <= M <= 2 * _TM_MAX:
        cap = min(cap, _round_up((M + 1) // 2, 8))
    cap = max(8, cap - (cap % 8))
    c = cap
    while c >= 8:
        if M % c == 0:
            return c, M                   # exact divisor -> no padding pass
        c -= 8
    tm = max(8, cap)                      # fallback: minimal zero padding
    return tm, _round_up(M, tm)


def _pick_k_tile(K: int):
    """Pick the d_input tile. Full K unless large; then a 128-multiple divisor."""
    if K <= _K_TILE_THRESHOLD:
        return K
    for cand in (512, 256, 128):
        if K % cand == 0:
            return cand
    return K                              # no clean divisor: keep full K


def _linear_relu_kernel(x_ref, w_ref, b_ref, o_ref):
    # Full-K path: x_ref (tm, K), w_ref (K, tn), b_ref (1, tn), o_ref (tm, tn).
    y = jnp.dot(x_ref[...], w_ref[...], preferred_element_type=jnp.float32)
    y = y + b_ref[...].astype(jnp.float32)
    o_ref[...] = jnp.maximum(y, 0.0).astype(o_ref.dtype)


def _linear_relu_acc_kernel(x_ref, w_ref, b_ref, o_ref, acc_ref):
    # K-tiled path: accumulate in f32 scratch, epilogue on the last K step.
    k = pl.program_id(2)

    @pl.when(k == 0)
    def _():
        acc_ref[...] = jnp.zeros_like(acc_ref)

    acc_ref[...] += jnp.dot(x_ref[...], w_ref[...],
                            preferred_element_type=jnp.float32)

    @pl.when(k == pl.num_programs(2) - 1)
    def _():
        y = acc_ref[...] + b_ref[...].astype(jnp.float32)
        o_ref[...] = jnp.maximum(y, 0.0).astype(o_ref.dtype)


@functools.partial(jax.jit, static_argnames=("compute_dtype",))
def linear_transform_layer(x, weight, bias, compute_dtype=None):
    """x: (B, S, d_input); weight: (d_model, d_input) [PyTorch layout]; bias: (d_model,).

    Returns relu(x @ weight.T + bias) with dtype == x.dtype (dropout = eval identity).
    compute_dtype (e.g. jnp.bfloat16) optionally casts x/weight before the matmul;
    accumulation / bias / ReLU stay in f32 either way.
    """
    B, S, d_input = x.shape
    d_model = weight.shape[0]
    M = B * S
    out_dtype = x.dtype

    # ---- tile selection (static under jit) ------------------------------------
    tm, M_pad = _pick_row_tile(M)
    d_model_pad = _round_up(d_model, 128)             # lane-dense output columns
    tn = d_model_pad
    for cand in (512, 256, 128):
        if d_model_pad % cand == 0:
            tn = cand
            break
    tk = _pick_k_tile(d_input)
    nm, nj, nk = M_pad // tm, d_model_pad // tn, d_input // tk

    # ---- wrapper-side plumbing (one-time, tiny for weight/bias) ---------------
    x2d = x.reshape(M, d_input)
    wt = weight.T                                       # (d_input, d_model)
    if compute_dtype is not None:
        x2d = x2d.astype(compute_dtype)
        wt = wt.astype(compute_dtype)
    if M_pad != M:
        x2d = jnp.pad(x2d, ((0, M_pad - M), (0, 0)))    # fallback only
    if d_model_pad != d_model:
        wt = jnp.pad(wt, ((0, 0), (0, d_model_pad - d_model)))
        bias_p = jnp.pad(bias, (0, d_model_pad - d_model))
    else:
        bias_p = bias
    b2d = bias_p.reshape(1, d_model_pad)

    # ---- VMEM budget (double-buffered tiles) & cost estimate ------------------
    in_bytes = jnp.dtype(x2d.dtype).itemsize
    out_bytes = jnp.dtype(out_dtype).itemsize
    vmem_need = 2 * (tm * tk * in_bytes + tk * tn * in_bytes
                     + tn * 4 + tm * tn * out_bytes) + tm * tn * 4
    vmem_limit = int(min(64 << 20, max(32 << 20, 2 * vmem_need)))
    cost = pl.CostEstimate(
        flops=2 * M_pad * d_input * d_model_pad,
        transcendentals=0,
        bytes_accessed=(M_pad * d_input * in_bytes
                        + d_input * d_model_pad * in_bytes
                        + d_model_pad * 4
                        + M_pad * d_model_pad * out_bytes),
    )

    # ---- grid / specs ----------------------------------------------------------
    if nk == 1:
        grid = (nm, nj)
        in_specs = [
            pl.BlockSpec((tm, d_input), lambda i, j: (i, 0)),   # x rows (pipelined)
            pl.BlockSpec((d_input, tn), lambda i, j: (0, j)),   # weight (resident per j)
            pl.BlockSpec((1, tn), lambda i, j: (0, j)),         # bias
        ]
        out_specs = pl.BlockSpec((tm, tn), lambda i, j: (i, j))
        scratch = []
        kernel = _linear_relu_kernel
        semantics = ("parallel", "parallel")
    else:
        grid = (nm, nj, nk)
        in_specs = [
            pl.BlockSpec((tm, tk), lambda i, j, k: (i, k)),
            pl.BlockSpec((tk, tn), lambda i, j, k: (k, j)),
            pl.BlockSpec((1, tn), lambda i, j, k: (0, j)),
        ]
        out_specs = pl.BlockSpec((tm, tn), lambda i, j, k: (i, j))
        scratch = [pltpu.VMEM((tm, tn), jnp.float32)]
        kernel = _linear_relu_acc_kernel
        semantics = ("parallel", "parallel", "arbitrary")

    out2d = pl.pallas_call(
        kernel,
        out_shape=jax.ShapeDtypeStruct((M_pad, d_model_pad), out_dtype),
        grid_spec=pltpu.PrefetchScalarGridSpec(
            num_scalar_prefetch=0,
            grid=grid,
            in_specs=in_specs,
            out_specs=out_specs,
            scratch_shapes=scratch,
        ),
        compiler_params=pltpu.CompilerParams(
            dimension_semantics=semantics,
            vmem_limit_bytes=vmem_limit),
        cost_estimate=cost,
    )(x2d, wt, b2d)

    out2d = out2d[:M, :d_model]            # drop padded rows / lane-pad columns
    return out2d.reshape(B, S, d_model)


if __name__ == "__main__":
    # Small shapes consistent with the module: d_input=32, d_model=64.
    B, S, d_input, d_model = 2, 8, 32, 64

    key = jax.random.PRNGKey(0)
    kx, kw, kb = jax.random.split(key, 3)

    # Deterministic init mimicking nn.Linear's default (U[-1/sqrt(fan_in), 1/sqrt(fan_in)]).
    bound = 1.0 / (d_input ** 0.5)
    weight = jax.random.uniform(kw, (d_model, d_input), jnp.float32, -bound, bound)
    bias = jax.random.uniform(kb, (d_model,), jnp.float32, -bound, bound)

    x = jax.random.normal(kx, (B, S, d_input), jnp.float32)

    out = linear_transform_layer(x, weight, bias)
    out = jax.block_until_ready(out)

    # Reference check in plain JAX (eval-mode forward: relu(linear1(x))).
    ref = jnp.maximum(x @ weight.T + bias, 0.0)
    assert out.shape == (B, S, d_model)
    assert jnp.allclose(out, ref, atol=1e-5, rtol=1e-5)

    print("KERNEL_OK")
</pallas_src>

<mosaic_0001>
module attributes {stable_mosaic.version = 11 : i64} {
  func.func @_linear_relu_kernel(%arg0: i32, %arg1: i32, %arg2: memref<8x32xf32, #tpu.memory_space<vmem>>, %arg3: memref<32x128xf32, #tpu.memory_space<vmem>>, %arg4: memref<1x128xf32, #tpu.memory_space<vmem>>, %arg5: memref<8x128xf32, #tpu.memory_space<vmem>>) attributes {dimension_semantics = [#tpu.dimension_semantics<parallel>, #tpu.dimension_semantics<parallel>], iteration_bounds = array<i64: 2, 1>, scalar_prefetch = 0 : i64, scratch_operands = 0 : i64, tpu.core_type = #tpu.core_type<tc>, window_params = [{transform_indices = @transform_0, window_bounds = array<i64: 8, 32>}, {transform_indices = @transform_1, window_bounds = array<i64: 32, 128>}, {transform_indices = @transform_2, window_bounds = array<i64: 1, 128>}, {transform_indices = @transform_3, window_bounds = array<i64: 8, 128>}]} {
    %c0 = arith.constant 0 : index
    %c0_0 = arith.constant 0 : index
    %0 = vector.load %arg2[%c0, %c0_0] : memref<8x32xf32, #tpu.memory_space<vmem>>, vector<8x32xf32>
    %c0_1 = arith.constant 0 : index
    %c0_2 = arith.constant 0 : index
    %1 = vector.load %arg3[%c0_1, %c0_2] : memref<32x128xf32, #tpu.memory_space<vmem>>, vector<32x128xf32>
    %cst = arith.constant dense<0.000000e+00> : vector<8x128xf32>
    %2 = tpu.matmul %0, %1, %cst {dimension_numbers = #tpu.dot_dimension_numbers<[1], [0], [0], [1], [0, 0, 1, 1], [], []>} : vector<8x32xf32>, vector<32x128xf32>, vector<8x128xf32> -> vector<8x128xf32>
    %c0_3 = arith.constant 0 : index
    %c0_4 = arith.constant 0 : index
    %3 = vector.load %arg4[%c0_3, %c0_4] : memref<1x128xf32, #tpu.memory_space<vmem>>, vector<1x128xf32>
    %4 = vector.broadcast %3 : vector<1x128xf32> to vector<8x128xf32>
    %5 = arith.addf %2, %4 : vector<8x128xf32>
    %cst_5 = arith.constant 0.000000e+00 : f32
    %6 = vector.broadcast %cst_5 : f32 to vector<8x128xf32>
    %7 = arith.maximumf %5, %6 : vector<8x128xf32>
    %c0_6 = arith.constant 0 : index
    %c0_7 = arith.constant 0 : index
    %8 = vector.load %arg5[%c0_6, %c0_7] : memref<8x128xf32, #tpu.memory_space<vmem>>, vector<8x128xf32>
    tpu.vector_store %arg5[%c0_6, %c0_7], %7 {strides = array<i32>} : memref<8x128xf32, #tpu.memory_space<vmem>>, vector<8x128xf32>,
    return
  }
  func.func @transform_0(%arg0: i32, %arg1: i32) -> (i32, i32) {
    %c0_i32 = arith.constant 0 : i32
    %c0_i32_0 = arith.constant 0 : i32
    return %arg0, %c0_i32 : i32, i32
  }
  func.func @transform_1(%arg0: i32, %arg1: i32) -> (i32, i32) {
    %c0_i32 = arith.constant 0 : i32
    %c0_i32_0 = arith.constant 0 : i32
    return %c0_i32, %arg1 : i32, i32
  }
  func.func @transform_2(%arg0: i32, %arg1: i32) -> (i32, i32) {
    %c0_i32 = arith.constant 0 : i32
    %c0_i32_0 = arith.constant 0 : i32
    return %c0_i32, %arg1 : i32, i32
  }
  func.func @transform_3(%arg0: i32, %arg1: i32) -> (i32, i32) {
    %c0_i32 = arith.constant 0 : i32
    return %arg0, %arg1 : i32, i32
  }
}

</mosaic_0001>

<llo_original>
// kernel: linear_transform_layer.1
$region0: #{linear_transform_layer.1}
  #allocation0 [shape = 'u32[]', space=smem, size = 0x4, offset = 0x4, fixed_abs, tag = 'smem constant byte address 0x4 - core index']
  #allocation1 [shape = 'u32[144,128]{1,0:T(1,128)}', space=vmem, size = 0x12000, scoped, tag = 'internal scratch']
  %s0 = inlined_call_operand.vmem [shape: f32[16,32], index: 0, kind: input, shape index: {}]
  %s1 = inlined_call_operand.vmem [shape: f32[32,128], index: 1, kind: input, shape index: {}]
  %s2 = inlined_call_operand.vmem [shape: f32[1,128], index: 2, kind: input, shape index: {}]
  %s3 = inlined_call_operand.vmem [shape: f32[16,128], index: 3, kind: output, shape index: {}]
  %s4 = sld [smem:[#allocation0]]
  $region45: #{linear_transform_layer.1} parent=0
    _
  %s6 = ssub.s32 1, %s4
  %s7 = scalar_select 0, %s6, %s4
  loop: start=0, step=1, limit=4
  $region2: #{linear_transform_layer.1} parent=0 // loop_pre_header
    _
  $region3: #{linear_transform_layer.1} parent=0 // loop_header
    %s9 = sphi 0, %s13
    %p10 = scmp.ge.s32.totalorder %s9, 4
    %s16 = sphi 0, %s28
    %s17 = sphi 0, %s24
    %s18 = sphi 0, %s16
    %s19 = sphi 0, %s17
    %s20 = sphi 0, %s18
    %s21 = sphi 0, %s19
    %s31 = sphi 0, %s33
    %s34 = sphi 0, %s31
    %s35 = sphi 0, %s34
    %s51 = sphi 0, %s35
    %s57 = sphi 0, %s59
    %s60 = sphi 0, %s57
    %s61 = sphi 0, %s60
    %s77 = sphi 0, %s61
    %s83 = sphi 0, %s85
    %s86 = sphi 0, %s83
    %s87 = sphi 0, %s86
    %s103 = sphi 0, %s87
    %s111 = sphi 0, %s113
    %s114 = sphi 0, %s111
    %s115 = sphi 0, %s114
    %s131 = sphi 0, %s115
  $region4: #{linear_transform_layer.1} parent=0 // loop_header_branch
    %12 = sbr.rel (%p10) target = $region8
  $region5: #{linear_transform_layer.1} parent=0 // loop_body
    %s14 = ssub.s32 %s9, 1
    %s15 = ssub.s32 %s9, 2
    %s22 = sadd.s32 1, %s17
    %p23 = scmp.ge.s32.totalorder %s22, 1
    %s24 = scalar_select %p23, 0, %s22
    %s25 = sadd.s32 1, %s16
    %s26 = scalar_select %p23, %s25, %s16
    %p27 = scmp.ge.s32.totalorder %s26, 2
    %s28 = scalar_select %p27, 0, %s26
    %s29 = ssub.s32 %s16, %s28
    %p30 = scmp.eq.s32.totalorder %s29, 0
    %s32 = sadd.s32 %s31, 1
    %s33 = scalar_select %p30, %s31, %s32
    %p36 = pneg %p30
    %p37 = scmp.eq.s32.totalorder %s9, 1
    %p38 = por %p36, %p37
    %p39 = scmp.ne.s32.totalorder %s31, %s34
    %p40 = scmp.eq.s32.totalorder %s9, 0
    %p41 = por %p39, %p40
    %p42 = scmp.ne.s32.totalorder %s31, %s34
    %p43 = scmp.eq.s32.totalorder %s14, 1
    %p44 = por %p42, %p43
    %p45 = scmp.ne.s32.totalorder %s34, %s35
    %p46 = scmp.eq.s32.totalorder %s14, 0
    %p47 = por %p45, %p46
    %p48 = scmp.ne.s32.totalorder %s34, %s35
    %p49 = scmp.eq.s32.totalorder %s15, 1
    %p50 = por %p48, %p49
    %p52 = scmp.ne.s32.totalorder %s35, %s51
    %p53 = scmp.eq.s32.totalorder %s15, 0
    %p54 = por %p52, %p53
    %s55 = ssub.s32 %s17, %s24
    %p56 = scmp.eq.s32.totalorder %s55, 0
    %s58 = sadd.s32 %s57, 1
    %s59 = scalar_select %p56, %s57, %s58
    %p62 = pneg %p56
    %p63 = scmp.eq.s32.totalorder %s9, 1
    %p64 = por %p62, %p63
    %p65 = scmp.ne.s32.totalorder %s57, %s60
    %p66 = scmp.eq.s32.totalorder %s9, 0
    %p67 = por %p65, %p66
    %p68 = scmp.ne.s32.totalorder %s57, %s60
    %p69 = scmp.eq.s32.totalorder %s14, 1
    %p70 = por %p68, %p69
    %p71 = scmp.ne.s32.totalorder %s60, %s61
    %p72 = scmp.eq.s32.totalorder %s14, 0
    %p73 = por %p71, %p72
    %p74 = scmp.ne.s32.totalorder %s60, %s61
    %p75 = scmp.eq.s32.totalorder %s15, 1
    %p76 = por %p74, %p75
    %p78 = scmp.ne.s32.totalorder %s61, %s77
    %p79 = scmp.eq.s32.totalorder %s15, 0
    %p80 = por %p78, %p79
    %s81 = ssub.s32 %s17, %s24
    %p82 = scmp.eq.s32.totalorder %s81, 0
    %s84 = sadd.s32 %s83, 1
    %s85 = scalar_select %p82, %s83, %s84
    %p88 = pneg %p82
    %p89 = scmp.eq.s32.totalorder %s9, 1
    %p90 = por %p88, %p89
    %p91 = scmp.ne.s32.totalorder %s83, %s86
    %p92 = scmp.eq.s32.totalorder %s9, 0
    %p93 = por %p91, %p92
    %p94 = scmp.ne.s32.totalorder %s83, %s86
    %p95 = scmp.eq.s32.totalorder %s14, 1
    %p96 = por %p94, %p95
    %p97 = scmp.ne.s32.totalorder %s86, %s87
    %p98 = scmp.eq.s32.totalorder %s14, 0
    %p99 = por %p97, %p98
    %p100 = scmp.ne.s32.totalorder %s86, %s87
    %p101 = scmp.eq.s32.totalorder %s15, 1
    %p102 = por %p100, %p101
    %p104 = scmp.ne.s32.totalorder %s87, %s103
    %p105 = scmp.eq.s32.totalorder %s15, 0
    %p106 = por %p104, %p105
    %s107 = ssub.s32 %s16, %s28
    %s108 = ssub.s32 %s17, %s24
    %s109 = sor.u32 %s107, %s108
    %p110 = scmp.eq.s32.totalorder %s109, 0
    %s112 = sadd.s32 %s111, 1
    %s113 = scalar_select %p110, %s111, %s112
    %p116 = pneg %p110
    %p117 = scmp.eq.s32.totalorder %s9, 1
    %p118 = por %p116, %p117
    %p119 = scmp.ne.s32.totalorder %s111, %s114
    %p120 = scmp.eq.s32.totalorder %s9, 0
    %p121 = por %p119, %p120
    %p122 = scmp.ne.s32.totalorder %s111, %s114
    %p123 = scmp.eq.s32.totalorder %s14, 1
    %p124 = por %p122, %p123
    %p125 = scmp.ne.s32.totalorder %s114, %s115
    %p126 = scmp.eq.s32.totalorder %s14, 0
    %p127 = por %p125, %p126
    %p128 = scmp.ne.s32.totalorder %s114, %s115
    %p129 = scmp.eq.s32.totalorder %s15, 1
    %p130 = por %p128, %p129
    %p132 = scmp.ne.s32.totalorder %s115, %s131
    %p133 = scmp.eq.s32.totalorder %s15, 0
    %p134 = por %p132, %p133
    %p135 = scmp.le.s32.totalorder 1, %s9
    %p136 = scmp.lt.s32.totalorder %s9, 3
    %p137 = pnand %p135, %p136
    %p138 = pneg %p137
    // Predicated region
    $region9: #{linear_transform_layer.1} parent=5 // pred_check
      _
    $region10: #{linear_transform_layer.1} parent=5 // pred_check_branch
      %140 = sbr.rel (%p137) target = $region12
    $region11: #{linear_transform_layer.1} parent=5 // pred_region
      %s141 = ssub.s32 %s9, 1
      // Predicated region
      $region13: #{linear_transform_layer.1} parent=11 // pred_check
        %p142 = pneg %p73
      $region14: #{linear_transform_layer.1} parent=11 // pred_check_branch
        %144 = sbr.rel (%p142) target = $region16
      $region15: #{linear_transform_layer.1} parent=11 // pred_region
        %p145 = scmp.lt.s32.totalorder %s19, 0
        %s146 = scalar_select %p145, %s19, 0
        %s147 = smul.addr %s146, 8
        %s148 = scalar_lea.vmem %s1, %s147
      $region16: #{linear_transform_layer.1} parent=11 // pred_fallthru
        _
      // Predicated region
      $region17: #{linear_transform_layer.1} parent=11 // pred_check
        %p149 = pneg %p99
      $region18: #{linear_transform_layer.1} parent=11 // pred_check_branch
        %151 = sbr.rel (%p149) target = $region20
      $region19: #{linear_transform_layer.1} parent=11 // pred_region
        %p152 = scmp.lt.s32.totalorder %s19, 0
        %s153 = scalar_select %p152, %s19, 0
        %s154 = scalar_lea.vmem %s2, %s153
      $region20: #{linear_transform_layer.1} parent=11 // pred_fallthru
        _
    $region12: #{linear_transform_layer.1} parent=5 // pred_fallthru
      _
    %p155 = scmp.lt.s32.totalorder %s9, 2
    // Predicated region
    $region21: #{linear_transform_layer.1} parent=5 // pred_check
      %p156 = pneg %p155
    $region22: #{linear_transform_layer.1} parent=5 // pred_check_branch
      %158 = sbr.rel (%p156) target = $region24
    $region23: #{linear_transform_layer.1} parent=5 // pred_region
      // Predicated region
      $region25: #{linear_transform_layer.1} parent=23 // pred_check
        %p159 = pneg %p41
      $region26: #{linear_transform_layer.1} parent=23 // pred_check_branch
        %161 = sbr.rel (%p159) target = $region28
      $region27: #{linear_transform_layer.1} parent=23 // pred_region
        %p162 = scmp.lt.s32.totalorder %s16, 1
        %s163 = scalar_select %p162, %s16, 1
        %s164 = smul.addr %s163, 8
        %s165 = scalar_lea.vmem %s0, %s164
      $region28: #{linear_transform_layer.1} parent=23 // pred_fallthru
        _
    $region24: #{linear_transform_layer.1} parent=5 // pred_fallthru
      _
    %p166 = scmp.le.s32.totalorder 1, %s9
    %p167 = scmp.lt.s32.totalorder %s9, 3
    %p168 = pnand %p166, %p167
    %p169 = pneg %p168
    // Predicated region
    $region29: #{linear_transform_layer.1} parent=5 // pred_check
      _
    $region30: #{linear_transform_layer.1} parent=5 // pred_check_branch
      %171 = sbr.rel (%p168) target = $region32
    $region31: #{linear_transform_layer.1} parent=5 // pred_region
      %s172 = ssub.s32 %s9, 1
      %p173 = scmp.lt.s32.totalorder %s18, 1
      %s174 = scalar_select %p173, %s18, 1
      %s175 = smul.addr %s174, 8
      %s176 = scalar_lea.vmem %s0, %s175
      %p177 = pneg %p47
      %p178 = pneg %p44
      %p179 = scmp.lt.s32.totalorder %s19, 0
      %s180 = scalar_select %p179, %s19, 0
      %s181 = smul.addr %s180, 8
      %s182 = scalar_lea.vmem %s1, %s181
      %p183 = pneg %p73
      %p184 = pneg %p70
      %p185 = scmp.lt.s32.totalorder %s19, 0
      %s186 = scalar_select %p185, %s19, 0
      %s187 = scalar_lea.vmem %s2, %s186
      %p188 = pneg %p99
      %p189 = pneg %p96
      %p190 = pneg %p127
      %p191 = pneg %p124
      %p192 = scmp.lt.s32.totalorder %s18, 1
      %s193 = scalar_select %p192, %s18, 1
      %p194 = scmp.lt.s32.totalorder %s19, 0
      %s195 = scalar_select %p194, %s19, 0
      %s196 = sadd.s32 %s195, %s193
      %s197 = smul.addr %s196, 8
      %s198 = scalar_lea.vmem %s3, %s197
      %p199 = scmp.lt.s32.totalorder %s18, 1
      %s200 = scalar_select %p199, %s18, 1
      %s201 = smul.addr %s200, 8
      %s202 = scalar_lea.vmem %s0, %s201
      %p203 = scmp.lt.s32.totalorder %s19, 0
      %s204 = scalar_select %p203, %s19, 0
      %s205 = smul.addr %s204, 8
      %s206 = scalar_lea.vmem %s1, %s205
      %p207 = scmp.lt.s32.totalorder %s19, 0
      %s208 = scalar_select %p207, %s19, 0
      %s209 = scalar_lea.vmem %s2, %s208
      %p210 = scmp.lt.s32.totalorder %s18, 1
      %s211 = scalar_select %p210, %s18, 1
      %p212 = scmp.lt.s32.totalorder %s19, 0
      %s213 = scalar_select %p212, %s19, 0
      %s214 = sadd.s32 %s213, %s211
      %s215 = smul.addr %s214, 8
      %s216 = scalar_lea.vmem %s3, %s215
      %v217 = vld [vmem:[%s202] sm:$0xff]
      %v218 = vld [vmem:[%s206] sm:$0xff]
      %v219 = vld [vmem:[%s206 + $0x8] sm:$0xff]
      %v220 = vld [vmem:[%s206 + $0x10] sm:$0xff]
      %v221 = vld [vmem:[%s206 + $0x18] sm:$0xff]
      %v222 = vld [vmem:[%s209] sm:$0x1]
      %v224 = vlaneseq
      %v225 = vshrl.u32 %v224, 7
      %v226 = vsub.s32 0, %v225
      %v227 = vrot.slane %v222, %v226
      %vm229 = vcmask 261120
      %v231 = vsel %vm229, %v217, 0
      %233 = vmatprep.subr.mxu0 0.0
      %234 = vmatpush1.msra.mxu0 0.0
      %235 = vmatprep.subr.mxu0 0.0
      %236 = vmatpush1.msra.mxu0 0.0
      %237 = vmatprep.subr.mxu0 0.0
      %238 = vmatpush1.msra.mxu0 0.0
      %239 = vmatprep.subr.mxu0 0.0
      %240 = vmatpush1.msra.mxu0 0.0
      %241 = vmatprep.subr.mxu0 0.0
      %242 = vmatpush1.msra.mxu0 0.0
      %243 = vmatprep.subr.mxu0 0.0
      %244 = vmatpush1.msra.mxu0 0.0
      %245 = vmatprep.subr.mxu0 0.0
      %246 = vmatpush1.msra.mxu0 0.0
      %247 = vmatprep.subr.mxu0 0.0
      %248 = vmatpush1.msra.mxu0 0.0
      %249 = vmatprep.subr.mxu0 0.0
      %250 = vmatpush1.msra.mxu0 0.0
      %251 = vmatprep.subr.mxu0 0.0
      %252 = vmatpush1.msra.mxu0 0.0
      %253 = vmatprep.subr.mxu0 0.0
      %254 = vmatpush1.msra.mxu0 0.0
      %255 = vmatprep.subr.mxu0 0.0
      %256 = vmatpush1.msra.mxu0 0.0
      %257 = vmatprep.subr.mxu0 0.0
      %258 = vmatpush1.msra.mxu0 %v221
      %259 = vmatprep.subr.mxu0 0.0
      %260 = vmatpush1.msra.mxu0 %v220
      %261 = vmatprep.subr.mxu0 0.0
      %262 = vmatpush1.msra.mxu0 %v219
      %263 = vmatprep.subr.mxu0 0.0
      %264 = vmatpush1.msra.mxu0 %v218
      %265 = vmatprep.subr.mxu0 0.0
      %266 = vmatpush2.msra.mxu0 0.0
      %267 = vmatprep.subr.mxu0 0.0
      %268 = vmatpush2.msra.mxu0 0.0
      %269 = vmatprep.subr.mxu0 0.0
      %270 = vmatpush2.msra.mxu0 0.0
      %271 = vmatprep.subr.mxu0 0.0
      %272 = vmatpush2.msra.mxu0 0.0
      %273 = vmatprep.subr.mxu0 0.0
      %274 = vmatpush2.msra.mxu0 0.0
      %275 = vmatprep.subr.mxu0 0.0
      %276 = vmatpush2.msra.mxu0 0.0
      %277 = vmatprep.subr.mxu0 0.0
      %278 = vmatpush2.msra.mxu0 0.0
      %279 = vmatprep.subr.mxu0 0.0
      %280 = vmatpush2.msra.mxu0 0.0
      %281 = vmatprep.subr.mxu0 0.0
      %282 = vmatpush2.msra.mxu0 0.0
      %283 = vmatprep.subr.mxu0 0.0
      %284 = vmatpush2.msra.mxu0 0.0
      %285 = vmatprep.subr.mxu0 0.0
      %286 = vmatpush2.msra.mxu0 0.0
      %287 = vmatprep.subr.mxu0 0.0
      %288 = vmatpush2.msra.mxu0 0.0
      %289 = vmatprep.subr.mxu0 0.0
      %290 = vmatpush2.msra.mxu0 0.0
      %291 = vmatprep.subr.mxu0 0.0
      %292 = vmatpush2.msra.mxu0 0.0
      %293 = vmatprep.subr.mxu0 0.0
      %294 = vmatpush2.msra.mxu0 0.0
      %295 = vmatprep.subr.mxu0 0.0
      %296 = vmatpush2.msra.mxu0 0.0
      %297 = vmatprep.mubr.f32.mxu0 0.0
      %298 = vmatmul.mubr.f32.gmra.mxu0 %v231
      %v299 = vpop.f32.mrf.mxu0
      %v300 = vadd.f32 %v227, %v299
      %v301 = vpop.f32.mrf.mxu0
      %302 = vdwg.mxu0
      %v303 = vmax.f32 %v300, 0.0
      %304 = vst [vmem:[%s216] sm:$0xff] %v303
      %p305 = scmp.lt.s32.totalorder %s18, 1
      %s306 = scalar_select %p305, %s18, 1
      %p307 = scmp.lt.s32.totalorder %s19, 0
      %s308 = scalar_select %p307, %s19, 0
      %s309 = sadd.s32 %s308, %s306
      %s310 = smul.addr %s309, 8
      %s311 = scalar_lea.vmem %s3, %s310
      // Predicated region
      $region33: #{linear_transform_layer.1} parent=31 // pred_check
        %p312 = pneg %p124
      $region34: #{linear_transform_layer.1} parent=31 // pred_check_branch
        %314 = sbr.rel (%p312) target = $region36
      $region35: #{linear_transform_layer.1} parent=31 // pred_region
        _
      $region36: #{linear_transform_layer.1} parent=31 // pred_fallthru
        _
    $region32: #{linear_transform_layer.1} parent=5 // pred_fallthru
      _
    %p315 = scmp.le.s32.totalorder 2, %s9
    // Predicated region
    $region37: #{linear_transform_layer.1} parent=5 // pred_check
      %p316 = pneg %p315
    $region38: #{linear_transform_layer.1} parent=5 // pred_check_branch
      %318 = sbr.rel (%p316) target = $region40
    $region39: #{linear_transform_layer.1} parent=5 // pred_region
      %s319 = ssub.s32 %s9, 2
      // Predicated region
      $region41: #{linear_transform_layer.1} parent=39 // pred_check
        %p320 = pneg %p130
      $region42: #{linear_transform_layer.1} parent=39 // pred_check_branch
        %322 = sbr.rel (%p320) target = $region44
      $region43: #{linear_transform_layer.1} parent=39 // pred_region
        %p323 = scmp.lt.s32.totalorder %s20, 1
        %s324 = scalar_select %p323, %s20, 1
        %p325 = scmp.lt.s32.totalorder %s21, 0
        %s326 = scalar_select %p325, %s21, 0
        %s327 = sadd.s32 %s326, %s324
        %s328 = smul.addr %s327, 8
        %s329 = scalar_lea.vmem %s3, %s328
      $region44: #{linear_transform_layer.1} parent=39 // pred_fallthru
        _
    $region40: #{linear_transform_layer.1} parent=5 // pred_fallthru
      _
  $region6: #{linear_transform_layer.1} parent=0 // loop_footer
    %s13 = sadd.s32 1, %s9
  $region7: #{linear_transform_layer.1} parent=0 // loop_footer_branch
    %8 = sbr.rel target = $region3
  $region8: #{linear_transform_layer.1} parent=0 // loop_exit
    _

</llo_original>
